<compile_context>
chip_gen: v7x
topology: tpu7x:2x2x1
jax: 0.10.0
libtpu: 0.0.40
codegen_flags: <defaults>
</compile_context>

<pallas_src>
import functools

import jax
import jax.numpy as jnp
from jax.experimental import pallas as pl
from jax.experimental.pallas import tpu as pltpu


def _avgpool_kernel(x_ref, pm_ref, o_ref, *, pooling: int):
    """(tn, th, W) input tile -> (tn, th//p, Wo) output tile."""
    tn, th, w = x_ref.shape
    tho = th // pooling
    wo = pm_ref.shape[1]

    # H-direction pooling: sublane-strided loads accumulated in f32.
    acc = x_ref[:, pl.ds(0, tho, stride=pooling), :].astype(jnp.float32)
    for i in range(1, pooling):
        acc = acc + x_ref[:, pl.ds(i, tho, stride=pooling), :].astype(jnp.float32)

    # W-direction pooling + 1/p^2 scale as a single MXU matmul (lane stays dense).
    lhs = acc.reshape(tn * tho, w)
    pooled = jnp.dot(lhs, pm_ref[...], preferred_element_type=jnp.float32)
    o_ref[...] = pooled.reshape(tn, tho, wo).astype(o_ref.dtype)


def _largest_divisor_leq(n: int, cap: int, multiple_of: int = 1):
    """Largest divisor of n that is <= cap and a multiple of `multiple_of`."""
    cap = min(n, cap)
    d = (cap // multiple_of) * multiple_of
    while d >= multiple_of:
        if n % d == 0:
            return d
        d -= multiple_of
    return None


def _choose_tiles(N: int, H: int, W: int, pooling: int, itemsize: int,
                  target_bytes: int = 8 << 20, min_grid_steps: int = 4):
    """Pick (tn planes, th rows) per grid step."""
    row_bytes = W * itemsize
    plane_bytes = H * row_bytes

    # H tile: multiple of 8*p dividing H (satisfies the (8,128) constraint on
    # both the input and the pooled output block), or the full plane.
    if plane_bytes <= target_bytes:
        th = H
    else:
        cap_rows = max(1, target_bytes // row_bytes)
        th = _largest_divisor_leq(H, cap_rows, multiple_of=8 * pooling)
        if th is None:
            th = H  # no suitable divisor; fall back to whole plane per step

    # Plane tile: as many folded B*C planes as fit the byte budget.
    tile_rows_bytes = th * row_bytes
    cap_planes = max(1, target_bytes // tile_rows_bytes)
    tn = _largest_divisor_leq(N, cap_planes) or 1

    # Prefer >= min_grid_steps grid steps (v7x dual-TC sharding) as long as
    # tiles stay >= 1 MiB (otherwise per-step overhead dominates).
    steps = (N // tn) * (H // th)
    if steps < min_grid_steps and tn > 1:
        want = max(1, -(-N * (H // th) // min_grid_steps))  # ceil
        tn2 = _largest_divisor_leq(N, want)
        if tn2 is not None and tn2 * tile_rows_bytes >= (1 << 20):
            tn = tn2

    return tn, th


def avgpool2d(x: jax.Array, pooling: int = 2) -> jax.Array:
    """Equivalent of AvgPool(pooling).forward(x) for NCHW input."""
    B, C, H, W = x.shape
    Ho, Wo = H // pooling, W // pooling

    # PyTorch floor-mode pooling crops any remainder rows/cols.
    if H != Ho * pooling or W != Wo * pooling:
        x = x[:, :, : Ho * pooling, : Wo * pooling]
        H, W = Ho * pooling, Wo * pooling

    N = B * C
    itemsize = jnp.dtype(x.dtype).itemsize
    tn, th = _choose_tiles(N, H, W, pooling, itemsize)
    tho = th // pooling

    # NCHW-native: free metadata reshape, no HBM transpose / pad passes.
    x3 = x.reshape(N, H, W)

    # (W, Wo) pooling matrix carrying the 1/p^2 scale (W-pooling on the MXU).
    rows = jax.lax.broadcasted_iota(jnp.int32, (W, Wo), 0)
    cols = jax.lax.broadcasted_iota(jnp.int32, (W, Wo), 1)
    pool_mat = jnp.where(rows // pooling == cols,
                         1.0 / float(pooling * pooling), 0.0).astype(jnp.float32)

    grid = (N // tn, H // th)
    cost = pl.CostEstimate(
        flops=N * Ho * W * (pooling - 1) + 2 * N * Ho * W * Wo,
        transcendentals=0,
        bytes_accessed=(N * H * W + N * Ho * Wo) * itemsize + W * Wo * 4,
    )

    out = pl.pallas_call(
        functools.partial(_avgpool_kernel, pooling=pooling),
        out_shape=jax.ShapeDtypeStruct((N, Ho, Wo), x.dtype),
        grid=grid,
        in_specs=[
            pl.BlockSpec((tn, th, W), lambda n, h: (n, h, 0)),
            pl.BlockSpec((W, Wo), lambda n, h: (0, 0)),
        ],
        out_specs=pl.BlockSpec((tn, tho, Wo), lambda n, h: (n, h, 0)),
        compiler_params=pltpu.CompilerParams(
            dimension_semantics=("parallel", "parallel"),
            vmem_limit_bytes=48 << 20,
        ),
        cost_estimate=cost,
    )(x3, pool_mat)

    return out.reshape(B, C, Ho, Wo)


def _avgpool2d_ref(x: jax.Array, pooling: int = 2) -> jax.Array:
    """Pure-JAX reference (matches nn.AvgPool2d defaults)."""
    B, C, H, W = x.shape
    Ho, Wo = H // pooling, W // pooling
    xr = x[:, :, : Ho * pooling, : Wo * pooling]
    xr = xr.reshape(B, C, Ho, pooling, Wo, pooling)
    return xr.mean(axis=(3, 5)).astype(x.dtype)


if __name__ == "__main__":
    key = jax.random.PRNGKey(0)
    # Small HEALPix-ish input: batch=2, channels=4, spatial=16x16.
    x = jax.random.normal(key, (2, 4, 16, 16), dtype=jnp.float32)

    pooling = 2
    y = avgpool2d(x, pooling=pooling)
    y = jax.block_until_ready(y)

    y_ref = _avgpool2d_ref(x, pooling=pooling)
    assert y.shape == (2, 4, 8, 8), y.shape
    assert jnp.allclose(y, y_ref, atol=1e-6, rtol=1e-6), (
        "Pallas avgpool mismatch vs reference"
    )

    print("KERNEL_OK")
</pallas_src>

<mosaic_0001>
module attributes {stable_mosaic.version = 11 : i64} {
  func.func @_avgpool_kernel(%arg0: i32, %arg1: i32, %arg2: memref<8x16x16xf32, #tpu.memory_space<vmem>>, %arg3: memref<16x8xf32, #tpu.memory_space<vmem>>, %arg4: memref<8x8x8xf32, #tpu.memory_space<vmem>>) attributes {dimension_semantics = [#tpu.dimension_semantics<parallel>, #tpu.dimension_semantics<parallel>], iteration_bounds = array<i64: 1, 1>, scalar_prefetch = 0 : i64, scratch_operands = 0 : i64, tpu.core_type = #tpu.core_type<tc>, window_params = [{transform_indices = @transform_0, window_bounds = array<i64: 8, 16, 16>}, {pipeline_mode = #tpu.pipeline_mode<synchronous>, transform_indices = @transform_1, window_bounds = array<i64: 16, 8>}, {transform_indices = @transform_2, window_bounds = array<i64: 8, 8, 8>}]} {
    %c0 = arith.constant 0 : index
    %c0_0 = arith.constant 0 : index
    %c0_1 = arith.constant 0 : index
    %0 = tpu.strided_load %arg2[%c0, %c0_0, %c0_1] {strides = array<i32: 1, 2, 1>} : memref<8x16x16xf32, #tpu.memory_space<vmem>>, vector<8x8x16xf32>
    %c0_2 = arith.constant 0 : index
    %c1 = arith.constant 1 : index
    %c0_3 = arith.constant 0 : index
    %1 = tpu.strided_load %arg2[%c0_2, %c1, %c0_3] {strides = array<i32: 1, 2, 1>} : memref<8x16x16xf32, #tpu.memory_space<vmem>>, vector<8x8x16xf32>
    %2 = arith.addf %0, %1 : vector<8x8x16xf32>
    %3 = vector.shape_cast %2 : vector<8x8x16xf32> to vector<64x16xf32>
    %c0_4 = arith.constant 0 : index
    %c0_5 = arith.constant 0 : index
    %4 = vector.load %arg3[%c0_4, %c0_5] : memref<16x8xf32, #tpu.memory_space<vmem>>, vector<16x8xf32>
    %cst = arith.constant dense<0.000000e+00> : vector<64x8xf32>
    %5 = tpu.matmul %3, %4, %cst {dimension_numbers = #tpu.dot_dimension_numbers<[1], [0], [0], [1], [0, 0, 1, 1], [], []>} : vector<64x16xf32>, vector<16x8xf32>, vector<64x8xf32> -> vector<64x8xf32>
    %6 = vector.shape_cast %5 : vector<64x8xf32> to vector<8x8x8xf32>
    %c0_6 = arith.constant 0 : index
    %c0_7 = arith.constant 0 : index
    %c0_8 = arith.constant 0 : index
    %7 = vector.load %arg4[%c0_6, %c0_7, %c0_8] : memref<8x8x8xf32, #tpu.memory_space<vmem>>, vector<8x8x8xf32>
    tpu.vector_store %arg4[%c0_6, %c0_7, %c0_8], %6 {strides = array<i32>} : memref<8x8x8xf32, #tpu.memory_space<vmem>>, vector<8x8x8xf32>,
    return
  }
  func.func @transform_0(%arg0: i32, %arg1: i32) -> (i32, i32, i32) {
    %c0_i32 = arith.constant 0 : i32
    %c0_i32_0 = arith.constant 0 : i32
    return %arg0, %arg1, %c0_i32 : i32, i32, i32
  }
  func.func @transform_1(%arg0: i32, %arg1: i32) -> (i32, i32) {
    %c0_i32 = arith.constant 0 : i32
    %c0_i32_0 = arith.constant 0 : i32
    %c0_i32_1 = arith.constant 0 : i32
    return %c0_i32, %c0_i32_0 : i32, i32
  }
  func.func @transform_2(%arg0: i32, %arg1: i32) -> (i32, i32, i32) {
    %c0_i32 = arith.constant 0 : i32
    %c0_i32_0 = arith.constant 0 : i32
    return %arg0, %arg1, %c0_i32 : i32, i32, i32
  }
}

</mosaic_0001>

<llo_original>
// kernel: tpu_custom_call.1
$region0: #{tpu_custom_call.1}
  #allocation0 [shape = 'u32[]', space=smem, size = 0x4, offset = 0x4, fixed_abs, tag = 'smem constant byte address 0x4 - core index']
  #allocation1 [shape = 'u32[144,128]{1,0:T(1,128)}', space=vmem, size = 0x12000, scoped, tag = 'internal scratch']
  %s0 = inlined_call_operand.hbm [shape: f32[8,16,16], index: 0, kind: input, shape index: {}]
  %s1 = inlined_call_operand.vmem [shape: f32[16,8], index: 1, kind: input, shape index: {}]
  %s2 = inlined_call_operand.hbm [shape: f32[8,8,8], index: 2, kind: output, shape index: {}]
  %s3 = sld [smem:[#allocation0]]
  $region22: #{tpu_custom_call.1} parent=0
    _
  %s5 = ssub.s32 1, %s3
  %s6 = scalar_select 0, %s5, %s3
  $region1: #{tpu_custom_call.1} parent=0
    #allocation2 [shape = 'u8[65536]{0}', space=vmem, size = 0x10000, scoped, tag = 'input window, operand 0, single buffered']
    #allocation3 [shape = 's32[1]{0}', space=sflag, size = 0x4, scoped, tag = 'scoped memory for tpu_custom_call.1']
    #allocation4 [shape = 's32[1]{0}', space=sflag, size = 0x4, scoped, tag = 'scoped memory for tpu_custom_call.1']
    #allocation5 [shape = 'u8[32768]{0}', space=vmem, size = 0x8000, scoped, tag = 'output window, operand 0, single buffered']
    %7 = vsyncpa [#allocation3], 0
    %8 = vsyncpa [#allocation4], 0
    // Predicated region
    $region2: #{tpu_custom_call.1} parent=1 // pred_check
      _
    $region3: #{tpu_custom_call.1} parent=1 // pred_check_branch
      %10 = sbr.rel (0) target = $region5
    $region4: #{tpu_custom_call.1} parent=1 // pred_region
      %s12 = ssub.s32 2048, 2048
      %13 = vsyncadd [#allocation3], %s12
      %s14 = sshll.u32 [#allocation2], 4
      %s15 = int_to_ptr.vmem [resolvable:$true] %s14
      %20 = dma.hbm_to_vmem [thread:$0]  %s0, 2048, %s15, [#allocation3], 128, 128, 8
    $region5: #{tpu_custom_call.1} parent=1 // pred_fallthru
      _
    // Predicated region
    $region6: #{tpu_custom_call.1} parent=1 // pred_check
      _
    $region7: #{tpu_custom_call.1} parent=1 // pred_check_branch
      %22 = sbr.rel (0) target = $region9
    $region8: #{tpu_custom_call.1} parent=1 // pred_region
      _
    $region9: #{tpu_custom_call.1} parent=1 // pred_fallthru
      _
    // Predicated region
    $region10: #{tpu_custom_call.1} parent=1 // pred_check
      _
    $region11: #{tpu_custom_call.1} parent=1 // pred_check_branch
      %24 = sbr.rel (0) target = $region13
    $region12: #{tpu_custom_call.1} parent=1 // pred_region
      %25 = dma.done [#allocation3], 2048
    $region13: #{tpu_custom_call.1} parent=1 // pred_fallthru
      _
    %v26 = vld [vmem:[#allocation2] ss:$2 sm:$0xff]
    %s27 = scalar_lea.vmem [#allocation2], 16
    %v28 = vld [vmem:[%s27] ss:$2 sm:$0xff]
    %s29 = scalar_lea.vmem [#allocation2], 32
    %v30 = vld [vmem:[%s29] ss:$2 sm:$0xff]
    %s31 = scalar_lea.vmem [#allocation2], 48
    %v32 = vld [vmem:[%s31] ss:$2 sm:$0xff]
    %s33 = scalar_lea.vmem [#allocation2], 64
    %v34 = vld [vmem:[%s33] ss:$2 sm:$0xff]
    %s35 = scalar_lea.vmem [#allocation2], 80
    %v36 = vld [vmem:[%s35] ss:$2 sm:$0xff]
    %s37 = scalar_lea.vmem [#allocation2], 96
    %v38 = vld [vmem:[%s37] ss:$2 sm:$0xff]
    %s39 = scalar_lea.vmem [#allocation2], 112
    %v40 = vld [vmem:[%s39] ss:$2 sm:$0xff]
    %s41 = scalar_lea.vmem [#allocation2], 1
    %v42 = vld [vmem:[%s41] ss:$2 sm:$0xff]
    %s43 = scalar_lea.vmem [#allocation2], 17
    %v44 = vld [vmem:[%s43] ss:$2 sm:$0xff]
    %s45 = scalar_lea.vmem [#allocation2], 33
    %v46 = vld [vmem:[%s45] ss:$2 sm:$0xff]
    %s47 = scalar_lea.vmem [#allocation2], 49
    %v48 = vld [vmem:[%s47] ss:$2 sm:$0xff]
    %s49 = scalar_lea.vmem [#allocation2], 65
    %v50 = vld [vmem:[%s49] ss:$2 sm:$0xff]
    %s51 = scalar_lea.vmem [#allocation2], 81
    %v52 = vld [vmem:[%s51] ss:$2 sm:$0xff]
    %s53 = scalar_lea.vmem [#allocation2], 97
    %v54 = vld [vmem:[%s53] ss:$2 sm:$0xff]
    %s55 = scalar_lea.vmem [#allocation2], 113
    %v56 = vld [vmem:[%s55] ss:$2 sm:$0xff]
    %v57 = vadd.f32 %v26, %v42
    %v58 = vadd.f32 %v28, %v44
    %v59 = vadd.f32 %v30, %v46
    %v60 = vadd.f32 %v32, %v48
    %v61 = vadd.f32 %v34, %v50
    %v62 = vadd.f32 %v36, %v52
    %v63 = vadd.f32 %v38, %v54
    %v64 = vadd.f32 %v40, %v56
    %v65 = vld [vmem:[%s1] sm:$0xff]
    %v66 = vld [vmem:[%s1 + $0x8] sm:$0xff]
    %vm67 = vcmask 130048
    %v69 = vsel %vm67, %v57, 0
    %v72 = vsel %vm67, %v58, 0
    %v75 = vsel %vm67, %v59, 0
    %v78 = vsel %vm67, %v60, 0
    %v81 = vsel %vm67, %v61, 0
    %v84 = vsel %vm67, %v62, 0
    %v87 = vsel %vm67, %v63, 0
    %v90 = vsel %vm67, %v64, 0
    %92 = vmatprep.subr.mxu0 0.0
    %93 = vmatpush1.msra.mxu0 %v65
    %94 = vmatprep.subr.mxu0 0.0
    %95 = vmatpush1.msra.mxu0 %v66
    %96 = vmatprep.subr.mxu0 0.0
    %97 = vmatpush1.msra.mxu0 0.0
    %98 = vmatprep.subr.mxu0 0.0
    %99 = vmatpush1.msra.mxu0 0.0
    %100 = vmatprep.subr.mxu0 0.0
    %101 = vmatpush1.msra.mxu0 0.0
    %102 = vmatprep.subr.mxu0 0.0
    %103 = vmatpush1.msra.mxu0 0.0
    %104 = vmatprep.subr.mxu0 0.0
    %105 = vmatpush1.msra.mxu0 0.0
    %106 = vmatprep.subr.mxu0 0.0
    %107 = vmatpush1.msra.mxu0 0.0
    %108 = vmatprep.subr.mxu0 0.0
    %109 = vmatpush1.msra.mxu0 0.0
    %110 = vmatprep.subr.mxu0 0.0
    %111 = vmatpush1.msra.mxu0 0.0
    %112 = vmatprep.subr.mxu0 0.0
    %113 = vmatpush1.msra.mxu0 0.0
    %114 = vmatprep.subr.mxu0 0.0
    %115 = vmatpush1.msra.mxu0 0.0
    %116 = vmatprep.subr.mxu0 0.0
    %117 = vmatpush1.msra.mxu0 0.0
    %118 = vmatprep.subr.mxu0 0.0
    %119 = vmatpush1.msra.mxu0 0.0
    %120 = vmatprep.subr.mxu0 0.0
    %121 = vmatpush1.msra.mxu0 0.0
    %122 = vmatprep.subr.mxu0 0.0
    %123 = vmatpush1.msra.mxu0 0.0
    %124 = vmatprep.subr.mxu0 0.0
    %125 = vmatpush1.msra.mxu0 0.0
    %126 = vmatprep.subr.mxu0 0.0
    %127 = vmatpush1.msra.mxu0 0.0
    %128 = vmatprep.subr.mxu0 0.0
    %129 = vmatpush1.msra.mxu0 0.0
    %130 = vmatprep.subr.mxu0 0.0
    %131 = vmatpush1.msra.mxu0 0.0
    %132 = vmatprep.subr.mxu0 0.0
    %133 = vmatpush1.msra.mxu0 0.0
    %134 = vmatprep.subr.mxu0 0.0
    %135 = vmatpush1.msra.mxu0 0.0
    %136 = vmatprep.subr.mxu0 0.0
    %137 = vmatpush1.msra.mxu0 0.0
    %138 = vmatprep.subr.mxu0 0.0
    %139 = vmatpush1.msra.mxu0 0.0
    %140 = vmatprep.subr.mxu0 0.0
    %141 = vmatpush1.msra.mxu0 0.0
    %142 = vmatprep.subr.mxu0 0.0
    %143 = vmatpush1.msra.mxu0 0.0
    %144 = vmatprep.subr.mxu0 0.0
    %145 = vmatpush1.msra.mxu0 0.0
    %146 = vmatprep.subr.mxu0 0.0
    %147 = vmatpush1.msra.mxu0 0.0
    %148 = vmatprep.subr.mxu0 0.0
    %149 = vmatpush1.msra.mxu0 0.0
    %150 = vmatprep.subr.mxu0 0.0
    %151 = vmatpush1.msra.mxu0 0.0
    %152 = vmatprep.subr.mxu0 0.0
    %153 = vmatpush1.msra.mxu0 0.0
    %154 = vmatprep.subr.mxu0 0.0
    %155 = vmatpush1.msra.mxu0 0.0
    %156 = vmatprep.mubr.f32.mxu0 0.0
    %157 = vmatmul.mubr.f32.gmra.mrb[0].mxu0 %v69
    %v158 = vpop.f32.mrb[0].mxu0
    %v159 = vadd.f32 0.0, %v158
    %v160 = vpop.f32.mrb[0].mxu0
    %161 = vmatprep.mubr.f32.mxu0 0.0
    %162 = vmatmul.mubr.f32.gmra.mrb[0].mxu0 %v72
    %v163 = vpop.f32.mrb[0].mxu0
    %v164 = vadd.f32 0.0, %v163
    %v165 = vpop.f32.mrb[0].mxu0
    %166 = vmatprep.mubr.f32.mxu0 0.0
    %167 = vmatmul.mubr.f32.gmra.mrb[0].mxu0 %v75
    %v168 = vpop.f32.mrb[0].mxu0
    %v169 = vadd.f32 0.0, %v168
    %v170 = vpop.f32.mrb[0].mxu0
    %171 = vmatprep.mubr.f32.mxu0 0.0
    %172 = vmatmul.mubr.f32.gmra.mrb[0].mxu0 %v78
    %v173 = vpop.f32.mrb[0].mxu0
    %v174 = vadd.f32 0.0, %v173
    %v175 = vpop.f32.mrb[0].mxu0
    %176 = vmatprep.mubr.f32.mxu0 0.0
    %177 = vmatmul.mubr.f32.gmra.mrb[0].mxu0 %v81
    %v178 = vpop.f32.mrb[0].mxu0
    %v179 = vadd.f32 0.0, %v178
    %v180 = vpop.f32.mrb[0].mxu0
    %181 = vmatprep.mubr.f32.mxu0 0.0
    %182 = vmatmul.mubr.f32.gmra.mrb[0].mxu0 %v84
    %v183 = vpop.f32.mrb[0].mxu0
    %v184 = vadd.f32 0.0, %v183
    %v185 = vpop.f32.mrb[0].mxu0
    %186 = vmatprep.mubr.f32.mxu0 0.0
    %187 = vmatmul.mubr.f32.gmra.mrb[0].mxu0 %v87
    %v188 = vpop.f32.mrb[0].mxu0
    %v189 = vadd.f32 0.0, %v188
    %v190 = vpop.f32.mrb[0].mxu0
    %191 = vmatprep.mubr.f32.mxu0 0.0
    %192 = vmatmul.mubr.f32.gmra.mrb[0].mxu0 %v90
    %v193 = vpop.f32.mrb[0].mxu0
    %v194 = vadd.f32 0.0, %v193
    %v195 = vpop.f32.mrb[0].mxu0
    %196 = vdwg.mxu0
    %vm197 = vcmask 64512
    %198 = vst.msk [vmem:[#allocation5] sm:$0xff] %vm197, %v159
    %199 = vst.msk [vmem:[#allocation5 + $0x8] sm:$0xff] %vm197, %v164
    %200 = vst.msk [vmem:[#allocation5 + $0x10] sm:$0xff] %vm197, %v169
    %201 = vst.msk [vmem:[#allocation5 + $0x18] sm:$0xff] %vm197, %v174
    %202 = vst.msk [vmem:[#allocation5 + $0x20] sm:$0xff] %vm197, %v179
    %203 = vst.msk [vmem:[#allocation5 + $0x28] sm:$0xff] %vm197, %v184
    %204 = vst.msk [vmem:[#allocation5 + $0x30] sm:$0xff] %vm197, %v189
    %205 = vst.msk [vmem:[#allocation5 + $0x38] sm:$0xff] %vm197, %v194
    // Predicated region
    $region14: #{tpu_custom_call.1} parent=1 // pred_check
      _
    $region15: #{tpu_custom_call.1} parent=1 // pred_check_branch
      %207 = sbr.rel (0) target = $region17
    $region16: #{tpu_custom_call.1} parent=1 // pred_region
      %s209 = ssub.s32 1024, 1024
      %210 = vsyncadd [#allocation4], %s209
      %s211 = sshll.u32 [#allocation5], 4
      %s212 = int_to_ptr.vmem [resolvable:$true] %s211
      %217 = dma.vmem_to_hbm [thread:$0]  %s212, 1024, %s2, [#allocation4], 128, 128, 8
    $region17: #{tpu_custom_call.1} parent=1 // pred_fallthru
      _
    // Predicated region
    $region18: #{tpu_custom_call.1} parent=1 // pred_check
      _
    $region19: #{tpu_custom_call.1} parent=1 // pred_check_branch
      %219 = sbr.rel (0) target = $region21
    $region20: #{tpu_custom_call.1} parent=1 // pred_region
      %220 = dma.done [#allocation4], 1024
    $region21: #{tpu_custom_call.1} parent=1 // pred_fallthru
      _
    %221 = vsyncpa [#allocation3], 1
    %222 = vsyncpa [#allocation4], 1

</llo_original>
